<compile_context>
chip_gen: v5e
topology: v5e:2x2
jax: 0.10.0
libtpu: 0.0.40
codegen_flags: <defaults>
</compile_context>

<pallas_src>
import functools

import jax
import jax.numpy as jnp
from jax.experimental import pallas as pl
from jax.experimental.pallas import tpu as pltpu

_LANE = 128
_BLOCK_BYTES = 1 << 20          # ~1 MiB input block (2 MiB double-buffered)
_NUM_SPLITS = 2                 # megacore split; no-op on single-TC chips


def _round_down(x, m):
    return (x // m) * m


def _elementwise(mode, x):
    # x is float32
    if mode == "bce_logits_ones":
        # BCE-with-logits vs all-ones target == softplus(-x) (stable form).
        return jnp.maximum(-x, 0.0) + jnp.log1p(jnp.exp(-jnp.abs(x)))
    if mode == "bce_ones":
        # BCE vs all-ones target == -log(x); torch clamps log at -100.
        return -jnp.maximum(jnp.log(x), -100.0)
    if mode == "neg_sigmoid":
        return -jax.nn.sigmoid(x)
    if mode == "neg_identity":
        return -x
    raise ValueError(mode)


def _adv_loss_kernel(x_ref, out_ref, *, mode, bps, n_blocks, rem_elems,
                     full_elems, has_overhang):
    s = pl.program_id(0)          # split (parallel axis, megacore)
    i = pl.program_id(1)          # block within split (reduction axis)
    gb = s * bps + i              # global block index (may overhang by 1)

    @pl.when(i == 0)
    def _init():
        out_ref[...] = jnp.zeros_like(out_ref)

    # Elementwise transform in f32 (HBM traffic stays in the native dtype).
    x = x_ref[...].astype(jnp.float32)
    val = _elementwise(mode, x)
    # Per-block pre-reduction to one (8, 128) vreg: pure VPU adds (one add per
    # input vreg); the single cross-lane reduce happens in the wrapper.
    partial = val.reshape(-1, 8, _LANE).sum(axis=0)

    last = n_blocks - 1
    if rem_elems == full_elems:
        # No padding anywhere: every in-range block is fully valid.
        if has_overhang:
            @pl.when(gb <= last)
            def _acc():
                out_ref[...] += partial
        else:
            out_ref[...] += partial
    else:
        @pl.when(gb < last)
        def _acc_full():
            out_ref[...] += partial

        @pl.when(gb == last)
        def _acc_masked():
            # Only the final block can contain padding; mask it here so the
            # steady-state loop carries no per-element index math.
            lidx = (jax.lax.broadcasted_iota(jnp.int32, val.shape, 0) * _LANE
                    + jax.lax.broadcasted_iota(jnp.int32, val.shape, 1))
            masked = jnp.where(lidx < rem_elems, val, 0.0)
            out_ref[...] += masked.reshape(-1, 8, _LANE).sum(axis=0)


def _mean_reduce_xla(x, mode):
    return jnp.mean(_elementwise(mode, x.astype(jnp.float32)))


def _mean_reduce(x, mode):
    """mean(elementwise(x)) over all elements; hot path in a Pallas kernel."""
    n = int(x.size)
    itemsize = jnp.dtype(x.dtype).itemsize
    base = {4: 8, 2: 16, 1: 32}.get(itemsize, 8)   # sublane multiple per dtype

    # Degenerate / tiny inputs: the pallas_call dispatch dominates; let XLA
    # fuse it. (In production this threshold could be raised to ~1M elements.)
    if n < base * _LANE:
        return _mean_reduce_xla(x, mode)

    flat = jnp.ravel(x)                             # native dtype, no f32 copy
    rows = pl.cdiv(n, _LANE)
    pad = rows * _LANE - n
    if pad:
        # Only pad to the next lane multiple (< 128 elems); block-level padding
        # is handled by Pallas partial blocks + the in-kernel last-block mask.
        flat = jnp.pad(flat, (0, pad))
    x2d = flat.reshape(rows, _LANE)

    rows_cap = max(base, _round_down(_BLOCK_BYTES // (_LANE * itemsize), base))
    block_rows = max(base, min(rows_cap, _round_down(rows, base)))
    n_blocks = pl.cdiv(rows, block_rows)

    num_splits = _NUM_SPLITS if n_blocks >= _NUM_SPLITS else 1
    bps = pl.cdiv(n_blocks, num_splits)             # blocks per split
    has_overhang = (num_splits * bps != n_blocks)

    full_elems = block_rows * _LANE
    rem_elems = n - (n_blocks - 1) * full_elems     # valid elems in last block

    if has_overhang:
        # The final grid slot of the last split has no real block: clamp its
        # window to the last block and skip its accumulation in-kernel.
        def x_index(s, i):
            return (jnp.minimum(s * bps + i, n_blocks - 1), 0)
    else:
        def x_index(s, i):
            return (s * bps + i, 0)

    kernel = functools.partial(
        _adv_loss_kernel, mode=mode, bps=bps, n_blocks=n_blocks,
        rem_elems=rem_elems, full_elems=full_elems, has_overhang=has_overhang)

    partials = pl.pallas_call(
        kernel,
        out_shape=jax.ShapeDtypeStruct((num_splits, 8, _LANE), jnp.float32),
        grid=(num_splits, bps),
        in_specs=[pl.BlockSpec((block_rows, _LANE), x_index)],
        out_specs=pl.BlockSpec((None, 8, _LANE), lambda s, i: (s, 0, 0)),
        compiler_params=pltpu.CompilerParams(
            dimension_semantics=("parallel", "arbitrary")),
    )(x2d)
    # Final tiny reduction (num_splits * 1024 f32) + mean normalization.
    return jnp.sum(partials) / jnp.float32(n)


class AdvLoss:
    """JAX/Pallas port of the PyTorch AdvLoss module (no parameters)."""

    def __init__(self, loss_fn: str = "gan", relativistic: bool = False,
                 logit: bool = True):
        self.loss_fn = loss_fn
        self.relativistic = relativistic
        self.logit = logit

    def __call__(self, out, target=None):
        if self.relativistic:
            # target.mean(0, keepdim=True) is cheap glue; the hot path (the
            # elementwise BCE + global mean) runs in the Pallas kernel.
            # TODO(synk): fuse the broadcast subtraction into the kernel via a
            # (B, CHW/128, 128) layout to avoid materializing `diff` in HBM.
            diff = out - jnp.mean(target, axis=0, keepdims=True)
            mode = "bce_logits_ones" if self.logit else "bce_ones"
            return _mean_reduce(diff, mode)
        if self.loss_fn == "gan":
            mode = "bce_logits_ones" if self.logit else "bce_ones"
            return _mean_reduce(out, mode)
        if self.logit:
            return _mean_reduce(out, "neg_sigmoid")
        return _mean_reduce(out, "neg_identity")


def _softplus_neg(x):
    x = x.astype(jnp.float32)
    return jnp.maximum(-x, 0.0) + jnp.log1p(jnp.exp(-jnp.abs(x)))


if __name__ == "__main__":
    key = jax.random.PRNGKey(0)
    k0, k1, k2, k3 = jax.random.split(key, 4)

    # 1) Default path ('gan', logits): small NCHW discriminator output.
    x = jax.random.normal(k0, (2, 4, 16, 16), dtype=jnp.float32)
    loss = jax.block_until_ready(AdvLoss()(x))
    ref = jnp.mean(_softplus_neg(x))
    assert jnp.allclose(loss, ref, atol=1e-5, rtol=1e-5), (loss, ref)

    # 2) Non-128-multiple size: exercises the last-block mask + 2-way split.
    y = jax.random.normal(k1, (3, 5, 7, 11), dtype=jnp.float32)   # 1155 elems
    loss_y = jax.block_until_ready(AdvLoss()(y))
    ref_y = jnp.mean(_softplus_neg(y))
    assert jnp.allclose(loss_y, ref_y, atol=1e-5, rtol=1e-5), (loss_y, ref_y)

    # 3) Medium input with an odd block count: exercises the clamped overhang
    #    slot of the megacore split plus the mask-free steady-state blocks.
    z = jax.random.normal(k2, (5, 1, 2048, 128), dtype=jnp.float32)
    loss_z = jax.block_until_ready(AdvLoss()(z))
    ref_z = jnp.mean(_softplus_neg(z))
    assert jnp.allclose(loss_z, ref_z, atol=1e-4, rtol=1e-4), (loss_z, ref_z)

    # 4) Relativistic branch (XLA diff + same kernel).
    tgt = jax.random.normal(k3, (2, 4, 16, 16), dtype=jnp.float32)
    rel = jax.block_until_ready(AdvLoss(relativistic=True)(x, tgt))
    rel_ref = jnp.mean(_softplus_neg(x - jnp.mean(tgt, axis=0, keepdims=True)))
    assert jnp.allclose(rel, rel_ref, atol=1e-5, rtol=1e-5), (rel, rel_ref)

    # 5) Non-'gan' logit path: -mean(sigmoid(x)).
    ns = jax.block_until_ready(AdvLoss(loss_fn="ns", logit=True)(x))
    ns_ref = -jnp.mean(jax.nn.sigmoid(x.astype(jnp.float32)))
    assert jnp.allclose(ns, ns_ref, atol=1e-5, rtol=1e-5), (ns, ns_ref)

    # 6) bf16 input stays bf16 in HBM; the f32 cast happens inside the kernel.
    xb = x.astype(jnp.bfloat16)
    lb = jax.block_until_ready(AdvLoss()(xb))
    rb = jnp.mean(_softplus_neg(xb.astype(jnp.float32)))
    assert jnp.allclose(lb, rb, atol=1e-3, rtol=1e-3), (lb, rb)

    print("KERNEL_OK")
</pallas_src>

<mosaic_0001>
module attributes {stable_mosaic.version = 11 : i64} {
  func.func @_adv_loss_kernel(%arg0: i32, %arg1: i32, %arg2: memref<16x128xf32, #tpu.memory_space<vmem>>, %arg3: memref<1x8x128xf32, #tpu.memory_space<vmem>>) attributes {dimension_semantics = [#tpu.dimension_semantics<parallel>, #tpu.dimension_semantics<arbitrary>], iteration_bounds = array<i64: 1, 1>, scalar_prefetch = 0 : i64, scratch_operands = 0 : i64, tpu.core_type = #tpu.core_type<tc>, window_params = [{transform_indices = @transform_0, window_bounds = array<i64: 16, 128>}, {transform_indices = @transform_1, window_bounds = array<i64: 1, 8, 128>}]} {
    %c0_i32 = arith.constant 0 : i32
    %0 = arith.cmpi eq, %arg1, %c0_i32 : i32
    %1 = arith.extui %0 : i1 to i32
    %c0_i32_0 = arith.constant 0 : i32
    %2 = arith.cmpi ne, %1, %c0_i32_0 : i32
    scf.if %2 {
      %cst_11 = arith.constant 0.000000e+00 : f32
      %22 = vector.broadcast %cst_11 : f32 to vector<8x128xf32>
      %c0_12 = arith.constant 0 : index
      %c0_13 = arith.constant 0 : index
      %c0_14 = arith.constant 0 : index
      %23 = vector.load %arg3[%c0_12, %c0_13, %c0_14] : memref<1x8x128xf32, #tpu.memory_space<vmem>>, vector<1x8x128xf32>
      %24 = vector.shape_cast %23 : vector<1x8x128xf32> to vector<8x128xf32>
      %25 = vector.shape_cast %22 : vector<8x128xf32> to vector<1x8x128xf32>
      tpu.vector_store %arg3[%c0_12, %c0_13, %c0_14], %25 {strides = array<i32>} : memref<1x8x128xf32, #tpu.memory_space<vmem>>, vector<1x8x128xf32>,
    } else {
    }
    %c0 = arith.constant 0 : index
    %c0_1 = arith.constant 0 : index
    %3 = vector.load %arg2[%c0, %c0_1] : memref<16x128xf32, #tpu.memory_space<vmem>>, vector<16x128xf32>
    %cst = arith.constant 0.000000e+00 : f32
    %4 = vector.broadcast %cst : f32 to vector<16x128xf32>
    %5 = arith.subf %4, %3 : vector<16x128xf32>
    %cst_2 = arith.constant 0.000000e+00 : f32
    %6 = vector.broadcast %cst_2 : f32 to vector<16x128xf32>
    %7 = arith.maximumf %5, %6 : vector<16x128xf32>
    %8 = math.absf %3 : vector<16x128xf32>
    %cst_3 = arith.constant 0.000000e+00 : f32
    %9 = vector.broadcast %cst_3 : f32 to vector<16x128xf32>
    %10 = arith.subf %9, %8 : vector<16x128xf32>
    %11 = math.exp %10 : vector<16x128xf32>
    %12 = math.log1p %11 : vector<16x128xf32>
    %13 = arith.addf %7, %12 : vector<16x128xf32>
    %14 = vector.shape_cast %13 : vector<16x128xf32> to vector<2x8x128xf32>
    %cst_4 = arith.constant dense<0.000000e+00> : vector<8x128xf32>
    %15 = vector.multi_reduction <add>, %14, %cst_4 [0] : vector<2x8x128xf32> to vector<8x128xf32>
    %c0_5 = arith.constant 0 : index
    %c0_6 = arith.constant 0 : index
    %c0_7 = arith.constant 0 : index
    %16 = vector.load %arg3[%c0_5, %c0_6, %c0_7] : memref<1x8x128xf32, #tpu.memory_space<vmem>>, vector<1x8x128xf32>
    %17 = vector.shape_cast %16 : vector<1x8x128xf32> to vector<8x128xf32>
    %18 = arith.addf %17, %15 : vector<8x128xf32>
    %c0_8 = arith.constant 0 : index
    %c0_9 = arith.constant 0 : index
    %c0_10 = arith.constant 0 : index
    %19 = vector.load %arg3[%c0_8, %c0_9, %c0_10] : memref<1x8x128xf32, #tpu.memory_space<vmem>>, vector<1x8x128xf32>
    %20 = vector.shape_cast %19 : vector<1x8x128xf32> to vector<8x128xf32>
    %21 = vector.shape_cast %18 : vector<8x128xf32> to vector<1x8x128xf32>
    tpu.vector_store %arg3[%c0_8, %c0_9, %c0_10], %21 {strides = array<i32>} : memref<1x8x128xf32, #tpu.memory_space<vmem>>, vector<1x8x128xf32>,
    return
  }
  func.func @transform_0(%arg0: i32, %arg1: i32) -> (i32, i32) {
    %c1_i32 = arith.constant 1 : i32
    %0 = arith.muli %arg0, %c1_i32 : i32
    %1 = arith.addi %0, %arg1 : i32
    %c0_i32 = arith.constant 0 : i32
    %c0_i32_0 = arith.constant 0 : i32
    return %1, %c0_i32 : i32, i32
  }
  func.func @transform_1(%arg0: i32, %arg1: i32) -> (i32, i32, i32) {
    %c0_i32 = arith.constant 0 : i32
    %c0_i32_0 = arith.constant 0 : i32
    %c0_i32_1 = arith.constant 0 : i32
    return %arg0, %c0_i32, %c0_i32_0 : i32, i32, i32
  }
}

</mosaic_0001>

<llo_original>
// kernel: tpu_custom_call.1
$region0: #{tpu_custom_call.1}
  #allocation0 [shape = 'u32[]', space=smem, size = 0x4, offset = 0x4, fixed_abs, tag = 'smem constant byte address 0x4 - core index']
  #allocation1 [shape = 'u32[72,128]{1,0:T(1,128)}', space=vmem, size = 0x9000, scoped, tag = 'internal scratch']
  %s0 = inlined_call_operand.hbm [shape: f32[16,128], index: 0, kind: input, shape index: {}]
  %s1 = inlined_call_operand.hbm [shape: f32[1,8,128], index: 1, kind: output, shape index: {}]
  %s2 = sld [smem:[#allocation0]]
  $region22: #{tpu_custom_call.1} parent=0
    _
  %s4 = ssub.s32 1, %s2
  %s5 = scalar_select 0, %s4, %s2
  $region1: #{tpu_custom_call.1} parent=0
    #allocation2 [shape = 'u8[8192]{0}', space=vmem, size = 0x2000, scoped, tag = 'input window, operand 0, single buffered']
    #allocation3 [shape = 's32[1]{0}', space=sflag, size = 0x4, scoped, tag = 'scoped memory for tpu_custom_call.1']
    #allocation4 [shape = 's32[1]{0}', space=sflag, size = 0x4, scoped, tag = 'scoped memory for tpu_custom_call.1']
    #allocation5 [shape = 'u8[4096]{0}', space=vmem, size = 0x1000, scoped, tag = 'output window, operand 0, single buffered']
    %6 = vsyncpa [#allocation3], 0
    %7 = vsyncpa [#allocation4], 0
    // Predicated region
    $region2: #{tpu_custom_call.1} parent=1 // pred_check
      _
    $region3: #{tpu_custom_call.1} parent=1 // pred_check_branch
      %9 = sbr.rel (0) target = $region5
    $region4: #{tpu_custom_call.1} parent=1 // pred_region
      %s10 = sadd.s32 0, 0
      %s11 = smul.u32 2, %s10
      %13 = vsyncadd [#allocation3], 0
      %s14 = smul.addr %s11, 8
      %s15 = scalar_lea.hbm %s0, %s14
      %s16 = sshll.u32 %s15, 4
      %s17 = int_to_ptr.hbm [resolvable:$true] %s16
      %s18 = sshll.u32 [#allocation2], 4
      %s19 = int_to_ptr.vmem [resolvable:$true] %s18
      %24 = dma.hbm_to_vmem [thread:$0]  %s17, 256, %s19, [#allocation3], 128, 128, 8
    $region5: #{tpu_custom_call.1} parent=1 // pred_fallthru
      _
    // Predicated region
    $region6: #{tpu_custom_call.1} parent=1 // pred_check
      _
    $region7: #{tpu_custom_call.1} parent=1 // pred_check_branch
      %26 = sbr.rel (0) target = $region9
    $region8: #{tpu_custom_call.1} parent=1 // pred_region
      %28 = dma.done [#allocation3], 256
    $region9: #{tpu_custom_call.1} parent=1 // pred_fallthru
      _
    %s29 = sadd.s32 0, 0
    %s30 = smul.u32 2, %s29
    %p31 = scmp.eq.s32.totalorder 0, 0
    // Predicated region
    $region10: #{tpu_custom_call.1} parent=1 // pred_check
      %p32 = pneg %p31
    $region11: #{tpu_custom_call.1} parent=1 // pred_check_branch
      %34 = sbr.rel (%p32) target = $region13
    $region12: #{tpu_custom_call.1} parent=1 // pred_region
      %35 = vst [vmem:[#allocation5] sm:$0xff] 0.0
    $region13: #{tpu_custom_call.1} parent=1 // pred_fallthru
      _
    %v36 = vld [vmem:[#allocation2] sm:$0xff]
    %v37 = vld [vmem:[#allocation2 + $0x8] sm:$0xff]
    %v38 = vsub.f32 0.0, %v36
    %v39 = vsub.f32 0.0, %v37
    %v40 = vmax.f32 %v38, 0.0
    %v41 = vmax.f32 %v39, 0.0
    %v42 = vand.u32 2147483647, %v36
    %v43 = vand.u32 2147483647, %v37
    %v44 = vsub.f32 0.0, %v42
    %v45 = vsub.f32 0.0, %v43
    %v46 = vmul.f32 %v44, 1.442695
    %v47 = vpow.pop %v46
    %v48 = vmul.f32 %v45, 1.442695
    %v49 = vpow.pop %v48
    %v50 = vadd.f32 %v47, 1.0
    %v51 = vlog2.pop %v50
    %v52 = vmul.f32 %v51, 0.6931472
    %v53 = vmul.f32 -0.5, %v47
    %v54 = vadd.f32 %v53, 1.0
    %v55 = vmul.f32 %v54, %v47
    %v56 = vand.u32 2147483647, %v47
    %vm57 = vcmp.lt.f32.partialorder %v56, 0.0004427343
    %v58 = vsel %vm57, %v55, %v52
    %v59 = vadd.f32 %v49, 1.0
    %v60 = vlog2.pop %v59
    %v61 = vmul.f32 %v60, 0.6931472
    %v62 = vmul.f32 -0.5, %v49
    %v63 = vadd.f32 %v62, 1.0
    %v64 = vmul.f32 %v63, %v49
    %v65 = vand.u32 2147483647, %v49
    %vm66 = vcmp.lt.f32.partialorder %v65, 0.0004427343
    %v67 = vsel %vm66, %v64, %v61
    %v68 = vadd.f32 %v40, %v58
    %v69 = vadd.f32 %v41, %v67
    %v70 = vadd.f32 %v68, %v69
    %v71 = vld [vmem:[#allocation5] sm:$0xff]
    %v72 = vadd.f32 %v71, %v70
    %73 = vst [vmem:[#allocation5] sm:$0xff] %v72
    // Predicated region
    $region14: #{tpu_custom_call.1} parent=1 // pred_check
      _
    $region15: #{tpu_custom_call.1} parent=1 // pred_check_branch
      %75 = sbr.rel (0) target = $region17
    $region16: #{tpu_custom_call.1} parent=1 // pred_region
      %77 = vsyncadd [#allocation4], 0
      %s79 = sshll.u32 [#allocation5], 4
      %s80 = int_to_ptr.vmem [resolvable:$true] %s79
      %s81 = sshll.u32 %s1, 4
      %s82 = int_to_ptr.hbm [resolvable:$true] %s81
      %84 = dma.vmem_to_hbm [thread:$0]  %s80, 128, %s82, [#allocation4]
    $region17: #{tpu_custom_call.1} parent=1 // pred_fallthru
      _
    // Predicated region
    $region18: #{tpu_custom_call.1} parent=1 // pred_check
      _
    $region19: #{tpu_custom_call.1} parent=1 // pred_check_branch
      %86 = sbr.rel (0) target = $region21
    $region20: #{tpu_custom_call.1} parent=1 // pred_region
      %88 = dma.done [#allocation4], 128
    $region21: #{tpu_custom_call.1} parent=1 // pred_fallthru
      _
    %89 = vsyncpa [#allocation3], 1
    %90 = vsyncpa [#allocation4], 1

</llo_original>
